<compile_context>
chip_gen: v7x
topology: tpu7x:2x2x1
jax: 0.10.0
libtpu: 0.0.40
codegen_flags: <defaults>
</compile_context>

<pallas_src>
import jax
import jax.numpy as jnp
from jax.experimental import pallas as pl
from jax.experimental.pallas import tpu as pltpu


def _round_up(x, m):
    return (x + m - 1) // m * m


def _vmem_limit_bytes():
    """~3/4 of physical VMEM: ~96 MiB on v5e/v6e (128 MiB), 48 MiB on v7x (64 MiB)."""
    phys = 64 * 1024 * 1024                      # conservative fallback (v7x-safe)
    try:
        phys = int(pltpu.get_tpu_info().vmem_capacity_bytes)
    except Exception:
        pass
    return int(min(phys * 3 // 4, 100 * 1024 * 1024))


def _gated_bilinear_kernel(x_ref, g_ref, w1_ref, w2_ref, out_ref):
    """Fused  out = Bilinear2(tanh(Bilinear1(x, g)), g), both bilinears N-folded.

    x_ref  : (TB, IN)      streamed activations (bf16 when weights are bf16)
    g_ref  : (TB, G)       gates, f32 (VPU path)
    w1_ref : (IN, G*Hp)    W1r[i, j*Hp+h] = W_in[i, j, h]   (zero-padded h >= H)
    w2_ref : (Hp, G*Op)    W2a[h, j*Op+o] = W_out[h, j, o]  (zero-padded)
    out_ref: (TB, Op)      f32, lane-dense (Op % 128 == 0)
    """
    hp = w2_ref.shape[0]
    op = out_ref.shape[1]
    gdim = g_ref.shape[1]

    x = x_ref[...]
    if x.dtype != w1_ref.dtype:
        x = x.astype(w1_ref.dtype)
    g = g_ref[...]                                  # f32; gate fold stays f32 (v5e)

    # ---- Bilinear 1, N-folded: ONE MXU matmul (K = IN, N = G*Hp) ------------
    t1 = jnp.dot(x, w1_ref[...], preferred_element_type=jnp.float32)
    # Gate contraction: G gate-scaled adds on lane-aligned (Hp % 128 == 0)
    # static slices — pure VPU work, hidden under the MXU for small G.
    acc1 = g[:, 0:1] * t1[:, 0:hp]
    for j in range(1, gdim):
        acc1 = acc1 + g[:, j:j + 1] * t1[:, j * hp:(j + 1) * hp]
    hid = jnp.tanh(acc1)                            # f32 EUP; tanh(0)=0 in padding

    # ---- Bilinear 2, N-folded: ONE MXU matmul (K = Hp, N = G*Op) ------------
    t2 = jnp.dot(hid.astype(w2_ref.dtype), w2_ref[...],
                 preferred_element_type=jnp.float32)
    acc2 = g[:, 0:1] * t2[:, 0:op]
    for j in range(1, gdim):
        acc2 = acc2 + g[:, j:j + 1] * t2[:, j * op:(j + 1) * op]

    out_ref[...] = acc2                             # f32 -> f32 lane-dense store


def _gated_bilinear(x, g, w1r, w2a, out_dim, *, block_b=1024):
    """x: (B, IN), g: (B, G), w1r: (IN, G*Hp), w2a: (Hp, G*Op) -> (B, out_dim)."""
    B, in_dim = x.shape
    G = g.shape[1]
    hp = w2a.shape[0]
    op = w2a.shape[1] // G
    assert w1r.shape == (in_dim, G * hp) and w2a.shape == (hp, G * op)

    w_dtype = w1r.dtype
    x = x.astype(w_dtype)              # bf16 streamed input when weights are bf16
    g = g.astype(jnp.float32)          # gate fold + tanh stay f32 (v5e guard rail)

    # Batch tiling: balanced, 8-row-aligned tiles; >= 2 grid steps once B >= 16
    # so the "parallel" batch axis shards across v7x's two TensorCores, and
    # tail padding stays below one sublane tile.
    b8 = _round_up(max(B, 1), 8)
    n_tiles = max(1, pl.cdiv(b8, block_b))
    if B >= 16:
        n_tiles = max(n_tiles, 2)
    tb = _round_up(pl.cdiv(b8, n_tiles), 8)
    grid_b = pl.cdiv(b8, tb)
    b_pad = grid_b * tb
    if b_pad != B:
        x = jnp.pad(x, ((0, b_pad - B), (0, 0)))
        g = jnp.pad(g, ((0, b_pad - B), (0, 0)))

    w_bytes = w1r.size * w1r.dtype.itemsize + w2a.size * w2a.dtype.itemsize
    cost = pl.CostEstimate(
        flops=2 * b_pad * G * (in_dim * hp + hp * op) + 2 * b_pad * G * (hp + op),
        transcendentals=b_pad * hp,
        bytes_accessed=b_pad * (in_dim * x.dtype.itemsize + 4 * G + 4 * op) + w_bytes,
    )

    out = pl.pallas_call(
        _gated_bilinear_kernel,
        out_shape=jax.ShapeDtypeStruct((b_pad, op), jnp.float32),
        grid=(grid_b,),
        in_specs=[
            pl.BlockSpec((tb, in_dim), lambda i: (i, 0)),      # streamed activations
            pl.BlockSpec((tb, G), lambda i: (i, 0)),           # streamed gates
            pl.BlockSpec((in_dim, G * hp), lambda i: (0, 0)),  # VMEM-resident weights
            pl.BlockSpec((hp, G * op), lambda i: (0, 0)),      # VMEM-resident weights
        ],
        out_specs=pl.BlockSpec((tb, op), lambda i: (i, 0)),
        compiler_params=pltpu.CompilerParams(
            dimension_semantics=("parallel",),                 # shard batch across TCs
            vmem_limit_bytes=_vmem_limit_bytes(),
        ),
        cost_estimate=cost,
    )(x, g, w1r, w2a)

    return out[:B, :out_dim]


class GatedBilinearTransfer:
    """JAX/Pallas mirror of the PyTorch module (randn weights, no bias)."""

    def __init__(self, in_dim, gate_dim, hidden_dim, out_dim, target="h",
                 key=None, weight_dtype=jnp.bfloat16):
        self.target = target
        self.in_dim, self.gate_dim = in_dim, gate_dim
        self.hidden_dim, self.out_dim = hidden_dim, out_dim

        key = jax.random.PRNGKey(0) if key is None else key
        k1, k2 = jax.random.split(key)
        # Reference (PyTorch) layout: (first_dim, gate_dim, out_dim).
        self.w_in = jax.random.normal(k1, (in_dim, gate_dim, hidden_dim), jnp.float32)
        self.w_out = jax.random.normal(k2, (hidden_dim, gate_dim, out_dim), jnp.float32)

        # Kernel layouts, built once (lane-dense: pad H and O to 128 multiples).
        hp = _round_up(hidden_dim, 128)
        op = _round_up(out_dim, 128)
        #   W1r[i, (j*Hp + h)] = W_in[i, j, h]     (N-fold for bilinear 1)
        w1r = jnp.pad(self.w_in, ((0, 0), (0, 0), (0, hp - hidden_dim)))
        w1r = w1r.reshape(in_dim, gate_dim * hp)
        #   W2a[h, (j*Op + o)] = W_out[h, j, o]    (N-fold for bilinear 2)
        w2a = jnp.pad(self.w_out,
                      ((0, hp - hidden_dim), (0, 0), (0, op - out_dim)))
        w2a = w2a.reshape(hp, gate_dim * op)
        # bf16 weights (default) halve resident VMEM/HBM traffic and keep both
        # MXU operands on the bf16-native path of every TPU generation; the
        # accumulation inside the kernel stays f32 either way.
        self.w1r = w1r.astype(weight_dtype)
        self.w2a = w2a.astype(weight_dtype)

    def _apply(self, x, g):
        return _gated_bilinear(x, g, self.w1r, self.w2a, self.out_dim)

    def __call__(self, h, c, g):
        if self.target == "both":
            # Fuse h and c paths into ONE pallas_call by batch-stacking.
            B = h.shape[1]
            x = jnp.concatenate([jnp.squeeze(h, 0), jnp.squeeze(c, 0)], axis=0)
            gg = jnp.concatenate([g, g], axis=0)
            y = self._apply(x, gg)
            h = y[:B][None]
            c = y[B:][None]
        elif self.target == "h":
            h = self._apply(jnp.squeeze(h, 0), g)[None]
        elif self.target == "c":
            c = self._apply(jnp.squeeze(c, 0), g)[None]
        return h, c


def _reference(x, g, w1, w2):
    """Pure-JAX f32 reference of the (old-keepdim) bilinear->tanh->bilinear chain."""
    hid = jnp.tanh(jnp.einsum("bi,bj,ijh->bh", x, g, w1,
                              precision=jax.lax.Precision.HIGHEST))
    return jnp.einsum("bh,bj,hjo->bo", hid, g, w2,
                      precision=jax.lax.Precision.HIGHEST)


def _reference_bf16(x, g, w1, w2):
    """Quantization-matched reference for the bf16-weight / bf16-operand kernel."""
    def q(a):
        return a.astype(jnp.bfloat16).astype(jnp.float32)
    hid = jnp.tanh(jnp.einsum("bi,bj,ijh->bh", q(x), g, q(w1),
                              precision=jax.lax.Precision.HIGHEST))
    return jnp.einsum("bh,bj,hjo->bo", q(hid), g, q(w2),
                      precision=jax.lax.Precision.HIGHEST)


if __name__ == "__main__":
    key = jax.random.PRNGKey(0)
    kh, kc, kg, kw = jax.random.split(key, 4)

    B, IN_DIM, GATE_DIM, HIDDEN_DIM, OUT_DIM = 4, 16, 8, 32, 16
    h = jax.random.normal(kh, (1, B, IN_DIM), jnp.float32)
    c = jax.random.normal(kc, (1, B, IN_DIM), jnp.float32)
    g = jax.random.normal(kg, (B, GATE_DIM), jnp.float32)

    # Default (bf16-weight / bf16-MXU-operand) config, checked against a
    # quantization-matched f32-accumulation reference.
    mod = GatedBilinearTransfer(IN_DIM, GATE_DIM, HIDDEN_DIM, OUT_DIM,
                                target="both", key=kw)
    h_out, c_out = mod(h, c, g)
    jax.block_until_ready((h_out, c_out))
    ref_h = _reference_bf16(h[0], g, mod.w_in, mod.w_out)[None]
    ref_c = _reference_bf16(c[0], g, mod.w_in, mod.w_out)[None]
    assert h_out.shape == (1, B, OUT_DIM) and c_out.shape == (1, B, OUT_DIM)
    assert jnp.allclose(h_out, ref_h, atol=1e-2, rtol=1e-2)
    assert jnp.allclose(c_out, ref_c, atol=1e-2, rtol=1e-2)

    # Full-f32 config, checked tightly against the full-precision reference.
    mod32 = GatedBilinearTransfer(IN_DIM, GATE_DIM, HIDDEN_DIM, OUT_DIM,
                                  target="both", key=kw, weight_dtype=jnp.float32)
    h32, c32 = mod32(h, c, g)
    jax.block_until_ready((h32, c32))
    ref_h32 = _reference(h[0], g, mod32.w_in, mod32.w_out)[None]
    ref_c32 = _reference(c[0], g, mod32.w_in, mod32.w_out)[None]
    assert jnp.allclose(h32, ref_h32, atol=2e-3, rtol=2e-3)
    assert jnp.allclose(c32, ref_c32, atol=2e-3, rtol=2e-3)

    print("KERNEL_OK")
</pallas_src>

<mosaic_0001>
module attributes {stable_mosaic.version = 11 : i64} {
  func.func @_gated_bilinear_kernel(%arg0: i32, %arg1: memref<8x16xbf16, #tpu.memory_space<vmem>>, %arg2: memref<8x8xf32, #tpu.memory_space<vmem>>, %arg3: memref<16x1024xbf16, #tpu.memory_space<vmem>>, %arg4: memref<128x1024xbf16, #tpu.memory_space<vmem>>, %arg5: memref<8x128xf32, #tpu.memory_space<vmem>>) attributes {dimension_semantics = [#tpu.dimension_semantics<parallel>], iteration_bounds = array<i64: 1>, scalar_prefetch = 0 : i64, scratch_operands = 0 : i64, tpu.core_type = #tpu.core_type<tc>, window_params = [{transform_indices = @transform_0, window_bounds = array<i64: 8, 16>}, {transform_indices = @transform_1, window_bounds = array<i64: 8, 8>}, {pipeline_mode = #tpu.pipeline_mode<synchronous>, transform_indices = @transform_2, window_bounds = array<i64: 16, 1024>}, {pipeline_mode = #tpu.pipeline_mode<synchronous>, transform_indices = @transform_3, window_bounds = array<i64: 128, 1024>}, {transform_indices = @transform_4, window_bounds = array<i64: 8, 128>}]} {
    %c0 = arith.constant 0 : index
    %c0_0 = arith.constant 0 : index
    %0 = vector.load %arg1[%c0, %c0_0] : memref<8x16xbf16, #tpu.memory_space<vmem>>, vector<8x16xbf16>
    %c0_1 = arith.constant 0 : index
    %c0_2 = arith.constant 0 : index
    %1 = vector.load %arg2[%c0_1, %c0_2] : memref<8x8xf32, #tpu.memory_space<vmem>>, vector<8x8xf32>
    %c0_3 = arith.constant 0 : index
    %c0_4 = arith.constant 0 : index
    %2 = vector.load %arg3[%c0_3, %c0_4] : memref<16x1024xbf16, #tpu.memory_space<vmem>>, vector<16x1024xbf16>
    %cst = arith.constant dense<0.000000e+00> : vector<8x1024xf32>
    %3 = tpu.matmul %0, %2, %cst {dimension_numbers = #tpu.dot_dimension_numbers<[1], [0], [0], [1], [0, 0, 1, 1], [], []>} : vector<8x16xbf16>, vector<16x1024xbf16>, vector<8x1024xf32> -> vector<8x1024xf32>
    %4 = vector.extract_strided_slice %1 {offsets = [0, 0], sizes = [8, 1], strides = [1, 1]} : vector<8x8xf32> to vector<8x1xf32>
    %5 = vector.extract_strided_slice %3 {offsets = [0, 0], sizes = [8, 128], strides = [1, 1]} : vector<8x1024xf32> to vector<8x128xf32>
    %6 = vector.broadcast %4 : vector<8x1xf32> to vector<8x128xf32>
    %7 = arith.mulf %6, %5 : vector<8x128xf32>
    %8 = vector.extract_strided_slice %1 {offsets = [0, 1], sizes = [8, 1], strides = [1, 1]} : vector<8x8xf32> to vector<8x1xf32>
    %9 = vector.extract_strided_slice %3 {offsets = [0, 128], sizes = [8, 128], strides = [1, 1]} : vector<8x1024xf32> to vector<8x128xf32>
    %10 = vector.broadcast %8 : vector<8x1xf32> to vector<8x128xf32>
    %11 = arith.mulf %10, %9 : vector<8x128xf32>
    %12 = arith.addf %7, %11 : vector<8x128xf32>
    %13 = vector.extract_strided_slice %1 {offsets = [0, 2], sizes = [8, 1], strides = [1, 1]} : vector<8x8xf32> to vector<8x1xf32>
    %14 = vector.extract_strided_slice %3 {offsets = [0, 256], sizes = [8, 128], strides = [1, 1]} : vector<8x1024xf32> to vector<8x128xf32>
    %15 = vector.broadcast %13 : vector<8x1xf32> to vector<8x128xf32>
    %16 = arith.mulf %15, %14 : vector<8x128xf32>
    %17 = arith.addf %12, %16 : vector<8x128xf32>
    %18 = vector.extract_strided_slice %1 {offsets = [0, 3], sizes = [8, 1], strides = [1, 1]} : vector<8x8xf32> to vector<8x1xf32>
    %19 = vector.extract_strided_slice %3 {offsets = [0, 384], sizes = [8, 128], strides = [1, 1]} : vector<8x1024xf32> to vector<8x128xf32>
    %20 = vector.broadcast %18 : vector<8x1xf32> to vector<8x128xf32>
    %21 = arith.mulf %20, %19 : vector<8x128xf32>
    %22 = arith.addf %17, %21 : vector<8x128xf32>
    %23 = vector.extract_strided_slice %1 {offsets = [0, 4], sizes = [8, 1], strides = [1, 1]} : vector<8x8xf32> to vector<8x1xf32>
    %24 = vector.extract_strided_slice %3 {offsets = [0, 512], sizes = [8, 128], strides = [1, 1]} : vector<8x1024xf32> to vector<8x128xf32>
    %25 = vector.broadcast %23 : vector<8x1xf32> to vector<8x128xf32>
    %26 = arith.mulf %25, %24 : vector<8x128xf32>
    %27 = arith.addf %22, %26 : vector<8x128xf32>
    %28 = vector.extract_strided_slice %1 {offsets = [0, 5], sizes = [8, 1], strides = [1, 1]} : vector<8x8xf32> to vector<8x1xf32>
    %29 = vector.extract_strided_slice %3 {offsets = [0, 640], sizes = [8, 128], strides = [1, 1]} : vector<8x1024xf32> to vector<8x128xf32>
    %30 = vector.broadcast %28 : vector<8x1xf32> to vector<8x128xf32>
    %31 = arith.mulf %30, %29 : vector<8x128xf32>
    %32 = arith.addf %27, %31 : vector<8x128xf32>
    %33 = vector.extract_strided_slice %1 {offsets = [0, 6], sizes = [8, 1], strides = [1, 1]} : vector<8x8xf32> to vector<8x1xf32>
    %34 = vector.extract_strided_slice %3 {offsets = [0, 768], sizes = [8, 128], strides = [1, 1]} : vector<8x1024xf32> to vector<8x128xf32>
    %35 = vector.broadcast %33 : vector<8x1xf32> to vector<8x128xf32>
    %36 = arith.mulf %35, %34 : vector<8x128xf32>
    %37 = arith.addf %32, %36 : vector<8x128xf32>
    %38 = vector.extract_strided_slice %1 {offsets = [0, 7], sizes = [8, 1], strides = [1, 1]} : vector<8x8xf32> to vector<8x1xf32>
    %39 = vector.extract_strided_slice %3 {offsets = [0, 896], sizes = [8, 128], strides = [1, 1]} : vector<8x1024xf32> to vector<8x128xf32>
    %40 = vector.broadcast %38 : vector<8x1xf32> to vector<8x128xf32>
    %41 = arith.mulf %40, %39 : vector<8x128xf32>
    %42 = arith.addf %37, %41 : vector<8x128xf32>
    %43 = math.tanh %42 : vector<8x128xf32>
    %44 = arith.truncf %43 : vector<8x128xf32> to vector<8x128xbf16>
    %c0_5 = arith.constant 0 : index
    %c0_6 = arith.constant 0 : index
    %45 = vector.load %arg4[%c0_5, %c0_6] : memref<128x1024xbf16, #tpu.memory_space<vmem>>, vector<128x1024xbf16>
    %cst_7 = arith.constant dense<0.000000e+00> : vector<8x1024xf32>
    %46 = tpu.matmul %44, %45, %cst_7 {dimension_numbers = #tpu.dot_dimension_numbers<[1], [0], [0], [1], [0, 0, 1, 1], [], []>} : vector<8x128xbf16>, vector<128x1024xbf16>, vector<8x1024xf32> -> vector<8x1024xf32>
    %47 = vector.extract_strided_slice %1 {offsets = [0, 0], sizes = [8, 1], strides = [1, 1]} : vector<8x8xf32> to vector<8x1xf32>
    %48 = vector.extract_strided_slice %46 {offsets = [0, 0], sizes = [8, 128], strides = [1, 1]} : vector<8x1024xf32> to vector<8x128xf32>
    %49 = vector.broadcast %47 : vector<8x1xf32> to vector<8x128xf32>
    %50 = arith.mulf %49, %48 : vector<8x128xf32>
    %51 = vector.extract_strided_slice %1 {offsets = [0, 1], sizes = [8, 1], strides = [1, 1]} : vector<8x8xf32> to vector<8x1xf32>
    %52 = vector.extract_strided_slice %46 {offsets = [0, 128], sizes = [8, 128], strides = [1, 1]} : vector<8x1024xf32> to vector<8x128xf32>
    %53 = vector.broadcast %51 : vector<8x1xf32> to vector<8x128xf32>
    %54 = arith.mulf %53, %52 : vector<8x128xf32>
    %55 = arith.addf %50, %54 : vector<8x128xf32>
    %56 = vector.extract_strided_slice %1 {offsets = [0, 2], sizes = [8, 1], strides = [1, 1]} : vector<8x8xf32> to vector<8x1xf32>
    %57 = vector.extract_strided_slice %46 {offsets = [0, 256], sizes = [8, 128], strides = [1, 1]} : vector<8x1024xf32> to vector<8x128xf32>
    %58 = vector.broadcast %56 : vector<8x1xf32> to vector<8x128xf32>
    %59 = arith.mulf %58, %57 : vector<8x128xf32>
    %60 = arith.addf %55, %59 : vector<8x128xf32>
    %61 = vector.extract_strided_slice %1 {offsets = [0, 3], sizes = [8, 1], strides = [1, 1]} : vector<8x8xf32> to vector<8x1xf32>
    %62 = vector.extract_strided_slice %46 {offsets = [0, 384], sizes = [8, 128], strides = [1, 1]} : vector<8x1024xf32> to vector<8x128xf32>
    %63 = vector.broadcast %61 : vector<8x1xf32> to vector<8x128xf32>
    %64 = arith.mulf %63, %62 : vector<8x128xf32>
    %65 = arith.addf %60, %64 : vector<8x128xf32>
    %66 = vector.extract_strided_slice %1 {offsets = [0, 4], sizes = [8, 1], strides = [1, 1]} : vector<8x8xf32> to vector<8x1xf32>
    %67 = vector.extract_strided_slice %46 {offsets = [0, 512], sizes = [8, 128], strides = [1, 1]} : vector<8x1024xf32> to vector<8x128xf32>
    %68 = vector.broadcast %66 : vector<8x1xf32> to vector<8x128xf32>
    %69 = arith.mulf %68, %67 : vector<8x128xf32>
    %70 = arith.addf %65, %69 : vector<8x128xf32>
    %71 = vector.extract_strided_slice %1 {offsets = [0, 5], sizes = [8, 1], strides = [1, 1]} : vector<8x8xf32> to vector<8x1xf32>
    %72 = vector.extract_strided_slice %46 {offsets = [0, 640], sizes = [8, 128], strides = [1, 1]} : vector<8x1024xf32> to vector<8x128xf32>
    %73 = vector.broadcast %71 : vector<8x1xf32> to vector<8x128xf32>
    %74 = arith.mulf %73, %72 : vector<8x128xf32>
    %75 = arith.addf %70, %74 : vector<8x128xf32>
    %76 = vector.extract_strided_slice %1 {offsets = [0, 6], sizes = [8, 1], strides = [1, 1]} : vector<8x8xf32> to vector<8x1xf32>
    %77 = vector.extract_strided_slice %46 {offsets = [0, 768], sizes = [8, 128], strides = [1, 1]} : vector<8x1024xf32> to vector<8x128xf32>
    %78 = vector.broadcast %76 : vector<8x1xf32> to vector<8x128xf32>
    %79 = arith.mulf %78, %77 : vector<8x128xf32>
    %80 = arith.addf %75, %79 : vector<8x128xf32>
    %81 = vector.extract_strided_slice %1 {offsets = [0, 7], sizes = [8, 1], strides = [1, 1]} : vector<8x8xf32> to vector<8x1xf32>
    %82 = vector.extract_strided_slice %46 {offsets = [0, 896], sizes = [8, 128], strides = [1, 1]} : vector<8x1024xf32> to vector<8x128xf32>
    %83 = vector.broadcast %81 : vector<8x1xf32> to vector<8x128xf32>
    %84 = arith.mulf %83, %82 : vector<8x128xf32>
    %85 = arith.addf %80, %84 : vector<8x128xf32>
    %c0_8 = arith.constant 0 : index
    %c0_9 = arith.constant 0 : index
    %86 = vector.load %arg5[%c0_8, %c0_9] : memref<8x128xf32, #tpu.memory_space<vmem>>, vector<8x128xf32>
    tpu.vector_store %arg5[%c0_8, %c0_9], %85 {strides = array<i32>} : memref<8x128xf32, #tpu.memory_space<vmem>>, vector<8x128xf32>,
    return
  }
  func.func @transform_0(%arg0: i32) -> (i32, i32) {
    %c0_i32 = arith.constant 0 : i32
    %c0_i32_0 = arith.constant 0 : i32
    return %arg0, %c0_i32 : i32, i32
  }
  func.func @transform_1(%arg0: i32) -> (i32, i32) {
    %c0_i32 = arith.constant 0 : i32
    %c0_i32_0 = arith.constant 0 : i32
    return %arg0, %c0_i32 : i32, i32
  }
  func.func @transform_2(%arg0: i32) -> (i32, i32) {
    %c0_i32 = arith.constant 0 : i32
    %c0_i32_0 = arith.constant 0 : i32
    %c0_i32_1 = arith.constant 0 : i32
    return %c0_i32, %c0_i32_0 : i32, i32
  }
  func.func @transform_3(%arg0: i32) -> (i32, i32) {
    %c0_i32 = arith.constant 0 : i32
    %c0_i32_0 = arith.constant 0 : i32
    %c0_i32_1 = arith.constant 0 : i32
    return %c0_i32, %c0_i32_0 : i32, i32
  }
  func.func @transform_4(%arg0: i32) -> (i32, i32) {
    %c0_i32 = arith.constant 0 : i32
    %c0_i32_0 = arith.constant 0 : i32
    return %arg0, %c0_i32 : i32, i32
  }
}

</mosaic_0001>

<llo_original>
// kernel: tpu_custom_call.1
$region0: #{tpu_custom_call.1}
  #allocation0 [shape = 'u32[]', space=smem, size = 0x4, offset = 0x4, fixed_abs, tag = 'smem constant byte address 0x4 - core index']
  #allocation1 [shape = 'u32[144,128]{1,0:T(1,128)}', space=vmem, size = 0x12000, scoped, tag = 'internal scratch']
  %s0 = inlined_call_operand.hbm [shape: bf16[8,16], index: 0, kind: input, shape index: {}]
  %s1 = inlined_call_operand.hbm [shape: f32[8,8], index: 1, kind: input, shape index: {}]
  %s2 = inlined_call_operand.hbm [shape: bf16[16,1024], index: 2, kind: input, shape index: {}]
  %s3 = inlined_call_operand.hbm [shape: bf16[128,1024], index: 3, kind: input, shape index: {}]
  %s4 = inlined_call_operand.hbm [shape: f32[8,128], index: 4, kind: output, shape index: {}]
  %s5 = sld [smem:[#allocation0]]
  $region42: #{tpu_custom_call.1} parent=0
    _
  %s7 = ssub.s32 1, %s5
  %s8 = scalar_select 0, %s7, %s5
  $region1: #{tpu_custom_call.1} parent=0
    #allocation2 [shape = 'u8[2048]{0}', space=vmem, size = 0x800, scoped, tag = 'input window, operand 0, single buffered']
    #allocation3 [shape = 's32[1]{0}', space=sflag, size = 0x4, scoped, tag = 'scoped memory for tpu_custom_call.1']
    #allocation4 [shape = 's32[1]{0}', space=sflag, size = 0x4, scoped, tag = 'scoped memory for tpu_custom_call.1']
    #allocation5 [shape = 'u8[4096]{0}', space=vmem, size = 0x1000, scoped, tag = 'input window, operand 1, single buffered']
    #allocation6 [shape = 's32[1]{0}', space=sflag, size = 0x4, scoped, tag = 'scoped memory for tpu_custom_call.1']
    #allocation7 [shape = 'u8[32768]{0}', space=vmem, size = 0x8000, scoped, tag = 'input window, operand 2, single buffered']
    #allocation8 [shape = 'u8[262144]{0}', space=vmem, size = 0x40000, scoped, tag = 'input window, operand 3, single buffered']
    #allocation9 [shape = 's32[1]{0}', space=sflag, size = 0x4, scoped, tag = 'scoped memory for tpu_custom_call.1']
    #allocation10 [shape = 'u8[4096]{0}', space=vmem, size = 0x1000, scoped, tag = 'output window, operand 0, single buffered']
    %9 = vsyncpa [#allocation3], 0
    %10 = vsyncpa [#allocation6], 0
    %11 = vsyncpa [#allocation9], 0
    %12 = vsyncpa [#allocation4], 0
    // Predicated region
    $region2: #{tpu_custom_call.1} parent=1 // pred_check
      _
    $region3: #{tpu_custom_call.1} parent=1 // pred_check_branch
      %14 = sbr.rel (0) target = $region5
    $region4: #{tpu_custom_call.1} parent=1 // pred_region
      %s16 = ssub.s32 64, 64
      %17 = vsyncadd [#allocation3], %s16
      %s19 = sshll.u32 [#allocation2], 4
      %s20 = int_to_ptr.vmem [resolvable:$true] %s19
      %22 = dma.hbm_to_vmem [thread:$0]  %s0, 64, %s20, [#allocation3]
    $region5: #{tpu_custom_call.1} parent=1 // pred_fallthru
      _
    // Predicated region
    $region6: #{tpu_custom_call.1} parent=1 // pred_check
      _
    $region7: #{tpu_custom_call.1} parent=1 // pred_check_branch
      %24 = sbr.rel (0) target = $region9
    $region8: #{tpu_custom_call.1} parent=1 // pred_region
      %s26 = ssub.s32 128, 128
      %27 = vsyncadd [#allocation6], %s26
      %s29 = sshll.u32 [#allocation5], 4
      %s30 = int_to_ptr.vmem [resolvable:$true] %s29
      %32 = dma.hbm_to_vmem [thread:$0]  %s1, 128, %s30, [#allocation6]
    $region9: #{tpu_custom_call.1} parent=1 // pred_fallthru
      _
    // Predicated region
    $region10: #{tpu_custom_call.1} parent=1 // pred_check
      _
    $region11: #{tpu_custom_call.1} parent=1 // pred_check_branch
      %34 = sbr.rel (0) target = $region13
    $region12: #{tpu_custom_call.1} parent=1 // pred_region
      %s36 = ssub.s32 1024, 1024
      %37 = vsyncadd [#allocation6], %s36
      %s38 = sshll.u32 [#allocation7], 4
      %s39 = int_to_ptr.vmem [resolvable:$true] %s38
      %44 = dma.hbm_to_vmem [thread:$0]  %s2, 1024, %s39, [#allocation6], 512, 512, 32
    $region13: #{tpu_custom_call.1} parent=1 // pred_fallthru
      _
    // Predicated region
    $region14: #{tpu_custom_call.1} parent=1 // pred_check
      _
    $region15: #{tpu_custom_call.1} parent=1 // pred_check_branch
      %46 = sbr.rel (0) target = $region17
    $region16: #{tpu_custom_call.1} parent=1 // pred_region
      %s48 = ssub.s32 8192, 8192
      %49 = vsyncadd [#allocation9], %s48
      %s50 = sshll.u32 [#allocation8], 4
      %s51 = int_to_ptr.vmem [resolvable:$true] %s50
      %56 = dma.hbm_to_vmem [thread:$0]  %s3, 8192, %s51, [#allocation9], 512, 512, 32
    $region17: #{tpu_custom_call.1} parent=1 // pred_fallthru
      _
    // Predicated region
    $region18: #{tpu_custom_call.1} parent=1 // pred_check
      _
    $region19: #{tpu_custom_call.1} parent=1 // pred_check_branch
      %58 = sbr.rel (0) target = $region21
    $region20: #{tpu_custom_call.1} parent=1 // pred_region
      %59 = dma.done [#allocation3], 64
    $region21: #{tpu_custom_call.1} parent=1 // pred_fallthru
      _
    // Predicated region
    $region22: #{tpu_custom_call.1} parent=1 // pred_check
      _
    $region23: #{tpu_custom_call.1} parent=1 // pred_check_branch
      %61 = sbr.rel (0) target = $region25
    $region24: #{tpu_custom_call.1} parent=1 // pred_region
      %62 = dma.done [#allocation6], 128
    $region25: #{tpu_custom_call.1} parent=1 // pred_fallthru
      _
    // Predicated region
    $region26: #{tpu_custom_call.1} parent=1 // pred_check
      _
    $region27: #{tpu_custom_call.1} parent=1 // pred_check_branch
      %64 = sbr.rel (0) target = $region29
    $region28: #{tpu_custom_call.1} parent=1 // pred_region
      %65 = dma.done [#allocation6], 1024
    $region29: #{tpu_custom_call.1} parent=1 // pred_fallthru
      _
    // Predicated region
    $region30: #{tpu_custom_call.1} parent=1 // pred_check
      _
    $region31: #{tpu_custom_call.1} parent=1 // pred_check_branch
      %67 = sbr.rel (0) target = $region33
    $region32: #{tpu_custom_call.1} parent=1 // pred_region
      %68 = dma.done [#allocation9], 8192
    $region33: #{tpu_custom_call.1} parent=1 // pred_fallthru
      _
    %v70 = vld [vmem:[#allocation2] sm:$0xf]
    %v71 = vld [vmem:[#allocation5] sm:$0xff]
    %v72 = vld [vmem:[#allocation7] sm:$0xff]
    %v73 = vld [vmem:[#allocation7 + $0x8] sm:$0xff]
    %v74 = vld [vmem:[#allocation7 + $0x10] sm:$0xff]
    %v75 = vld [vmem:[#allocation7 + $0x18] sm:$0xff]
    %v76 = vld [vmem:[#allocation7 + $0x20] sm:$0xff]
    %v77 = vld [vmem:[#allocation7 + $0x28] sm:$0xff]
    %v78 = vld [vmem:[#allocation7 + $0x30] sm:$0xff]
    %v79 = vld [vmem:[#allocation7 + $0x38] sm:$0xff]
    %v88 = vunpack.c.l.b16 %v72
    %v89 = vunpack.c.h.b16 %v72
    %v90 = vunpack.c.l.b16 %v73
    %v91 = vunpack.c.h.b16 %v73
    %v92 = vunpack.c.l.b16 %v74
    %v93 = vunpack.c.h.b16 %v74
    %v94 = vunpack.c.l.b16 %v75
    %v95 = vunpack.c.h.b16 %v75
    %v96 = vunpack.c.l.b16 %v76
    %v97 = vunpack.c.h.b16 %v76
    %v98 = vunpack.c.l.b16 %v77
    %v99 = vunpack.c.h.b16 %v77
    %v100 = vunpack.c.l.b16 %v78
    %v101 = vunpack.c.h.b16 %v78
    %v102 = vunpack.c.l.b16 %v79
    %v103 = vunpack.c.h.b16 %v79
    %v104 = vpack.c.b16 %v96, %v88
    %v105 = vpack.c.b16 %v97, %v89
    %v106 = vpack.c.b16 %v98, %v90
    %v107 = vpack.c.b16 %v99, %v91
    %v108 = vpack.c.b16 %v100, %v92
    %v109 = vpack.c.b16 %v101, %v93
    %v110 = vpack.c.b16 %v102, %v94
    %v111 = vpack.c.b16 %v103, %v95
    %vm120 = vcmask 130048
    %v122 = vsel %vm120, %v70, 0
    %124 = vmatprep.subr.bf16.mxu0 %v105
    %125 = vmatpush1.bf16.msra.mxu0 %v104
    %126 = vmatprep.subr.bf16.mxu0 0
    %127 = vmatpush1.bf16.msra.mxu0 0
    %128 = vmatprep.subr.bf16.mxu0 0
    %129 = vmatpush1.bf16.msra.mxu0 0
    %130 = vmatprep.subr.bf16.mxu0 0
    %131 = vmatpush1.bf16.msra.mxu0 0
    %132 = vmatprep.subr.bf16.mxu0 0
    %133 = vmatpush1.bf16.msra.mxu0 0
    %134 = vmatprep.subr.bf16.mxu0 0
    %135 = vmatpush1.bf16.msra.mxu0 0
    %136 = vmatprep.subr.bf16.mxu0 0
    %137 = vmatpush1.bf16.msra.mxu0 0
    %138 = vmatprep.subr.bf16.mxu0 0
    %139 = vmatpush1.bf16.msra.mxu0 0
    %140 = vmatprep.subr.bf16.mxu0 0
    %141 = vmatpush1.bf16.msra.mxu0 0
    %142 = vmatprep.subr.bf16.mxu0 0
    %143 = vmatpush1.bf16.msra.mxu0 0
    %144 = vmatprep.subr.bf16.mxu0 0
    %145 = vmatpush1.bf16.msra.mxu0 0
    %146 = vmatprep.subr.bf16.mxu0 0
    %147 = vmatpush1.bf16.msra.mxu0 0
    %148 = vmatprep.subr.bf16.mxu0 0
    %149 = vmatpush1.bf16.msra.mxu0 0
    %150 = vmatprep.subr.bf16.mxu0 0
    %151 = vmatpush1.bf16.msra.mxu0 0
    %152 = vmatprep.subr.bf16.mxu0 0
    %153 = vmatpush1.bf16.msra.mxu0 0
    %154 = vmatprep.subr.bf16.mxu0 0
    %155 = vmatpush1.bf16.msra.mxu0 0
    %156 = vmatprep.mubr.bf16.mxu0 0
    %157 = vmatmul.mubr.bf16.gmra.mrb[0].mxu0 %v122
    %v158 = vpop.f32.mrb[0].mxu0
    %v159 = vadd.f32 0.0, %v158
    %v160 = vpop.f32.mrb[0].mxu0
    %v161 = vadd.f32 0.0, %v160
    %v162 = vpop.f32.mrb[0].mxu0
    %v163 = vpop.f32.mrb[0].mxu0
    %164 = vdwg.mxu0
    %165 = vmatprep.subr.bf16.mxu0 %v107
    %166 = vmatpush1.bf16.msra.mxu0 %v106
    %167 = vmatprep.subr.bf16.mxu0 0
    %168 = vmatpush1.bf16.msra.mxu0 0
    %169 = vmatprep.subr.bf16.mxu0 0
    %170 = vmatpush1.bf16.msra.mxu0 0
    %171 = vmatprep.subr.bf16.mxu0 0
    %172 = vmatpush1.bf16.msra.mxu0 0
    %173 = vmatprep.subr.bf16.mxu0 0
    %174 = vmatpush1.bf16.msra.mxu0 0
    %175 = vmatprep.subr.bf16.mxu0 0
    %176 = vmatpush1.bf16.msra.mxu0 0
    %177 = vmatprep.subr.bf16.mxu0 0
    %178 = vmatpush1.bf16.msra.mxu0 0
    %179 = vmatprep.subr.bf16.mxu0 0
    %180 = vmatpush1.bf16.msra.mxu0 0
    %181 = vmatprep.subr.bf16.mxu0 0
    %182 = vmatpush1.bf16.msra.mxu0 0
    %183 = vmatprep.subr.bf16.mxu0 0
    %184 = vmatpush1.bf16.msra.mxu0 0
    %185 = vmatprep.subr.bf16.mxu0 0
    %186 = vmatpush1.bf16.msra.mxu0 0
    %187 = vmatprep.subr.bf16.mxu0 0
    %188 = vmatpush1.bf16.msra.mxu0 0
    %189 = vmatprep.subr.bf16.mxu0 0
    %190 = vmatpush1.bf16.msra.mxu0 0
    %191 = vmatprep.subr.bf16.mxu0 0
    %192 = vmatpush1.bf16.msra.mxu0 0
    %193 = vmatprep.subr.bf16.mxu0 0
    %194 = vmatpush1.bf16.msra.mxu0 0
    %195 = vmatprep.subr.bf16.mxu0 0
    %196 = vmatpush1.bf16.msra.mxu0 0
    %197 = vmatprep.mubr.bf16.mxu0 0
    %198 = vmatmul.mubr.bf16.gmra.mrb[0].mxu0 %v122
    %v199 = vpop.f32.mrb[0].mxu0
    %v200 = vadd.f32 0.0, %v199
    %v201 = vpop.f32.mrb[0].mxu0
    %v202 = vadd.f32 0.0, %v201
    %v203 = vpop.f32.mrb[0].mxu0
    %v204 = vpop.f32.mrb[0].mxu0
    %205 = vdwg.mxu0
    %206 = vmatprep.subr.bf16.mxu0 %v109
    %207 = vmatpush1.bf16.msra.mxu0 %v108
    %208 = vmatprep.subr.bf16.mxu0 0
    %209 = vmatpush1.bf16.msra.mxu0 0
    %210 = vmatprep.subr.bf16.mxu0 0
    %211 = vmatpush1.bf16.msra.mxu0 0
    %212 = vmatprep.subr.bf16.mxu0 0
    %213 = vmatpush1.bf16.msra.mxu0 0
    %214 = vmatprep.subr.bf16.mxu0 0
    %215 = vmatpush1.bf16.msra.mxu0 0
    %216 = vmatprep.subr.bf16.mxu0 0
    %217 = vmatpush1.bf16.msra.mxu0 0
    %218 = vmatprep.subr.bf16.mxu0 0
    %219 = vmatpush1.bf16.msra.mxu0 0
    %220 = vmatprep.subr.bf16.mxu0 0
    %221 = vmatpush1.bf16.msra.mxu0 0
    %222 = vmatprep.subr.bf16.mxu0 0
    %223 = vmatpush1.bf16.msra.mxu0 0
    %224 = vmatprep.subr.bf16.mxu0 0
    %225 = vmatpush1.bf16.msra.mxu0 0
    %226 = vmatprep.subr.bf16.mxu0 0
    %227 = vmatpush1.bf16.msra.mxu0 0
    %228 = vmatprep.subr.bf16.mxu0 0
    %229 = vmatpush1.bf16.msra.mxu0 0
    %230 = vmatprep.subr.bf16.mxu0 0
    %231 = vmatpush1.bf16.msra.mxu0 0
    %232 = vmatprep.subr.bf16.mxu0 0
    %233 = vmatpush1.bf16.msra.mxu0 0
    %234 = vmatprep.subr.bf16.mxu0 0
    %235 = vmatpush1.bf16.msra.mxu0 0
    %236 = vmatprep.subr.bf16.mxu0 0
    %237 = vmatpush1.bf16.msra.mxu0 0
    %238 = vmatprep.mubr.bf16.mxu0 0
    %239 = vmatmul.mubr.bf16.gmra.mrb[0].mxu0 %v122
    %v240 = vpop.f32.mrb[0].mxu0
    %v241 = vadd.f32 0.0, %v240
    %v242 = vpop.f32.mrb[0].mxu0
    %v243 = vadd.f32 0.0, %v242
    %v244 = vpop.f32.mrb[0].mxu0
    %v245 = vpop.f32.mrb[0].mxu0
    %246 = vdwg.mxu0
    %247 = vmatprep.subr.bf16.mxu0 %v111
    %248 = vmatpush1.bf16.msra.mxu0 %v110
    %249 = vmatprep.subr.bf16.mxu0 0
    %250 = vmatpush1.bf16.msra.mxu0 0
    %251 = vmatprep.subr.bf16.mxu0 0
    %252 = vmatpush1.bf16.msra.mxu0 0
    %253 = vmatprep.subr.bf16.mxu0 0
    %254 = vmatpush1.bf16.msra.mxu0 0
    %255 = vmatprep.subr.bf16.mxu0 0
    %256 = vmatpush1.bf16.msra.mxu0 0
    %257 = vmatprep.subr.bf16.mxu0 0
    %258 = vmatpush1.bf16.msra.mxu0 0
    %259 = vmatprep.subr.bf16.mxu0 0
    %260 = vmatpush1.bf16.msra.mxu0 0
    %261 = vmatprep.subr.bf16.mxu0 0
    %262 = vmatpush1.bf16.msra.mxu0 0
    %263 = vmatprep.subr.bf16.mxu0 0
    %264 = vmatpush1.bf16.msra.mxu0 0
    %265 = vmatprep.subr.bf16.mxu0 0
    %266 = vmatpush1.bf16.msra.mxu0 0
    %267 = vmatprep.subr.bf16.mxu0 0
    %268 = vmatpush1.bf16.msra.mxu0 0
    %269 = vmatprep.subr.bf16.mxu0 0
    %270 = vmatpush1.bf16.msra.mxu0 0
    %271 = vmatprep.subr.bf16.mxu0 0
    %272 = vmatpush1.bf16.msra.mxu0 0
    %273 = vmatprep.subr.bf16.mxu0 0
    %274 = vmatpush1.bf16.msra.mxu0 0
    %275 = vmatprep.subr.bf16.mxu0 0
    %276 = vmatpush1.bf16.msra.mxu0 0
    %277 = vmatprep.subr.bf16.mxu0 0
    %278 = vmatpush1.bf16.msra.mxu0 0
    %279 = vmatprep.mubr.bf16.mxu0 0
    %280 = vmatmul.mubr.bf16.gmra.mrb[0].mxu0 %v122
    %v281 = vpop.f32.mrb[0].mxu0
    %v282 = vadd.f32 0.0, %v281
    %v283 = vpop.f32.mrb[0].mxu0
    %v284 = vadd.f32 0.0, %v283
    %v285 = vpop.f32.mrb[0].mxu0
    %v286 = vpop.f32.mrb[0].mxu0
    %287 = vdwg.mxu0
    %289 = vset.pattern.permute.xlu0 0
    %290 = vperm.xlu0 %289, %v71
    %v291 = vpop.permute.xlu0 %290
    %v293 = vmul.f32 %v291, %v159
    %294 = vset.pattern.permute.xlu0 1
    %295 = vperm.xlu0 %294, %v71
    %v296 = vpop.permute.xlu0 %295
    %v298 = vmul.f32 %v296, %v161
    %v299 = vadd.f32 %v293, %v298
    %300 = vset.pattern.permute.xlu0 2
    %301 = vperm.xlu0 %300, %v71
    %v302 = vpop.permute.xlu0 %301
    %v304 = vmul.f32 %v302, %v200
    %v305 = vadd.f32 %v299, %v304
    %306 = vset.pattern.permute.xlu0 3
    %307 = vperm.xlu0 %306, %v71
    %v308 = vpop.permute.xlu0 %307
    %v310 = vmul.f32 %v308, %v202
    %v311 = vadd.f32 %v305, %v310
    %312 = vset.pattern.permute.xlu0 4
    %313 = vperm.xlu0 %312, %v71
    %v314 = vpop.permute.xlu0 %313
    %v316 = vmul.f32 %v314, %v241
    %v317 = vadd.f32 %v311, %v316
    %318 = vset.pattern.permute.xlu0 5
    %319 = vperm.xlu0 %318, %v71
    %v320 = vpop.permute.xlu0 %319
    %v322 = vmul.f32 %v320, %v243
    %v323 = vadd.f32 %v317, %v322
    %324 = vset.pattern.permute.xlu0 6
    %325 = vperm.xlu0 %324, %v71
    %v326 = vpop.permute.xlu0 %325
    %v328 = vmul.f32 %v326, %v282
    %v329 = vadd.f32 %v323, %v328
    %330 = vset.pattern.permute.xlu0 7
    %331 = vperm.xlu0 %330, %v71
    %v332 = vpop.permute.xlu0 %331
    %v334 = vmul.f32 %v332, %v284
    %v335 = vadd.f32 %v329, %v334
    %v336 = vtanh.pop %v335
    %v337 = vpack.c.bf16 %v336, %v336
    %v338 = vld [vmem:[#allocation8] sm:$0xff]
    %v339 = vld [vmem:[#allocation8 + $0x8] sm:$0xff]
    %v340 = vld [vmem:[#allocation8 + $0x10] sm:$0xff]
    %v341 = vld [vmem:[#allocation8 + $0x18] sm:$0xff]
    %v342 = vld [vmem:[#allocation8 + $0x20] sm:$0xff]
    %v343 = vld [vmem:[#allocation8 + $0x28] sm:$0xff]
    %v344 = vld [vmem:[#allocation8 + $0x30] sm:$0xff]
    %v345 = vld [vmem:[#allocation8 + $0x38] sm:$0xff]
    %v346 = vld [vmem:[#allocation8 + $0x40] sm:$0xff]
    %v347 = vld [vmem:[#allocation8 + $0x48] sm:$0xff]
    %v348 = vld [vmem:[#allocation8 + $0x50] sm:$0xff]
    %v349 = vld [vmem:[#allocation8 + $0x58] sm:$0xff]
    %v350 = vld [vmem:[#allocation8 + $0x60] sm:$0xff]
    %v351 = vld [vmem:[#allocation8 + $0x68] sm:$0xff]
    %v352 = vld [vmem:[#allocation8 + $0x70] sm:$0xff]
    %v353 = vld [vmem:[#allocation8 + $0x78] sm:$0xff]
    %v354 = vld [vmem:[#allocation8 + $0x80] sm:$0xff]
    %v355 = vld [vmem:[#allocation8 + $0x88] sm:$0xff]
    %v356 = vld [vmem:[#allocation8 + $0x90] sm:$0xff]
    %v357 = vld [vmem:[#allocation8 + $0x98] sm:$0xff]
    %v358 = vld [vmem:[#allocation8 + $0xa0] sm:$0xff]
    %v359 = vld [vmem:[#allocation8 + $0xa8] sm:$0xff]
    %v360 = vld [vmem:[#allocation8 + $0xb0] sm:$0xff]
    %v361 = vld [vmem:[#allocation8 + $0xb8] sm:$0xff]
    %v362 = vld [vmem:[#allocation8 + $0xc0] sm:$0xff]
    %v363 = vld [vmem:[#allocation8 + $0xc8] sm:$0xff]
    %v364 = vld [vmem:[#allocation8 + $0xd0] sm:$0xff]
    %v365 = vld [vmem:[#allocation8 + $0xd8] sm:$0xff]
    %v366 = vld [vmem:[#allocation8 + $0xe0] sm:$0xff]
    %v367 = vld [vmem:[#allocation8 + $0xe8] sm:$0xff]
    %v368 = vld [vmem:[#allocation8 + $0xf0] sm:$0xff]
    %v369 = vld [vmem:[#allocation8 + $0xf8] sm:$0xff]
    %v370 = vld [vmem:[#allocation8 + $0x100] sm:$0xff]
    %v371 = vld [vmem:[#allocation8 + $0x108] sm:$0xff]
    %v372 = vld [vmem:[#allocation8 + $0x110] sm:$0xff]
    %v373 = vld [vmem:[#allocation8 + $0x118] sm:$0xff]
    %v374 = vld [vmem:[#allocation8 + $0x120] sm:$0xff]
    %v375 = vld [vmem:[#allocation8 + $0x128] sm:$0xff]
    %v376 = vld [vmem:[#allocation8 + $0x130] sm:$0xff]
    %v377 = vld [vmem:[#allocation8 + $0x138] sm:$0xff]
    %v378 = vld [vmem:[#allocation8 + $0x140] sm:$0xff]
    %v379 = vld [vmem:[#allocation8 + $0x148] sm:$0xff]
    %v380 = vld [vmem:[#allocation8 + $0x150] sm:$0xff]
    %v381 = vld [vmem:[#allocation8 + $0x158] sm:$0xff]
    %v382 = vld [vmem:[#allocation8 + $0x160] sm:$0xff]
    %v383 = vld [vmem:[#allocation8 + $0x168] sm:$0xff]
    %v384 = vld [vmem:[#allocation8 + $0x170] sm:$0xff]
    %v385 = vld [vmem:[#allocation8 + $0x178] sm:$0xff]
    %v386 = vld [vmem:[#allocation8 + $0x180] sm:$0xff]
    %v387 = vld [vmem:[#allocation8 + $0x188] sm:$0xff]
    %v388 = vld [vmem:[#allocation8 + $0x190] sm:$0xff]
    %v389 = vld [vmem:[#allocation8 + $0x198] sm:$0xff]
    %v390 = vld [vmem:[#allocation8 + $0x1a0] sm:$0xff]
    %v391 = vld [vmem:[#allocation8 + $0x1a8] sm:$0xff]
    %v392 = vld [vmem:[#allocation8 + $0x1b0] sm:$0xff]
    %v393 = vld [vmem:[#allocation8 + $0x1b8] sm:$0xff]
    %v394 = vld [vmem:[#allocation8 + $0x1c0] sm:$0xff]
    %v395 = vld [vmem:[#allocation8 + $0x1c8] sm:$0xff]
    %v396 = vld [vmem:[#allocation8 + $0x1d0] sm:$0xff]
    %v397 = vld [vmem:[#allocation8 + $0x1d8] sm:$0xff]
    %v398 = vld [vmem:[#allocation8 + $0x1e0] sm:$0xff]
    %v399 = vld [vmem:[#allocation8 + $0x1e8] sm:$0xff]
    %v400 = vld [vmem:[#allocation8 + $0x1f0] sm:$0xff]
    %v401 = vld [vmem:[#allocation8 + $0x1f8] sm:$0xff]
    %v466 = vunpack.c.l.b16 %v338
    %v467 = vunpack.c.h.b16 %v338
    %v468 = vunpack.c.l.b16 %v339
    %v469 = vunpack.c.h.b16 %v339
    %v470 = vunpack.c.l.b16 %v340
    %v471 = vunpack.c.h.b16 %v340
    %v472 = vunpack.c.l.b16 %v341
    %v473 = vunpack.c.h.b16 %v341
    %v474 = vunpack.c.l.b16 %v342
    %v475 = vunpack.c.h.b16 %v342
    %v476 = vunpack.c.l.b16 %v343
    %v477 = vunpack.c.h.b16 %v343
    %v478 = vunpack.c.l.b16 %v344
    %v479 = vunpack.c.h.b16 %v344
    %v480 = vunpack.c.l.b16 %v345
    %v481 = vunpack.c.h.b16 %v345
    %v482 = vunpack.c.l.b16 %v346
    %v483 = vunpack.c.h.b16 %v346
    %v484 = vunpack.c.l.b16 %v347
    %v485 = vunpack.c.h.b16 %v347
    %v486 = vunpack.c.l.b16 %v348
    %v487 = vunpack.c.h.b16 %v348
    %v488 = vunpack.c.l.b16 %v349
    %v489 = vunpack.c.h.b16 %v349
    %v490 = vunpack.c.l.b16 %v350
    %v491 = vunpack.c.h.b16 %v350
    %v492 = vunpack.c.l.b16 %v351
    %v493 = vunpack.c.h.b16 %v351
    %v494 = vunpack.c.l.b16 %v352
    %v495 = vunpack.c.h.b16 %v352
    %v496 = vunpack.c.l.b16 %v353
    %v497 = vunpack.c.h.b16 %v353
    %v498 = vunpack.c.l.b16 %v354
    %v499 = vunpack.c.h.b16 %v354
    %v500 = vunpack.c.l.b16 %v355
    %v501 = vunpack.c.h.b16 %v355
    %v502 = vunpack.c.l.b16 %v356
    %v503 = vunpack.c.h.b16 %v356
    %v504 = vunpack.c.l.b16 %v357
    %v505 = vunpack.c.h.b16 %v357
    %v506 = vunpack.c.l.b16 %v358
    %v507 = vunpack.c.h.b16 %v358
    %v508 = vunpack.c.l.b16 %v359
    %v509 = vunpack.c.h.b16 %v359
    %v510 = vunpack.c.l.b16 %v360
    %v511 = vunpack.c.h.b16 %v360
    %v512 = vunpack.c.l.b16 %v361
    %v513 = vunpack.c.h.b16 %v361
    %v514 = vunpack.c.l.b16 %v362
    %v515 = vunpack.c.h.b16 %v362
    %v516 = vunpack.c.l.b16 %v363
    %v517 = vunpack.c.h.b16 %v363
    %v518 = vunpack.c.l.b16 %v364
    %v519 = vunpack.c.h.b16 %v364
    %v520 = vunpack.c.l.b16 %v365
    %v521 = vunpack.c.h.b16 %v365
    %v522 = vunpack.c.l.b16 %v366
    %v523 = vunpack.c.h.b16 %v366
    %v524 = vunpack.c.l.b16 %v367
    %v525 = vunpack.c.h.b16 %v367
    %v526 = vunpack.c.l.b16 %v368
    %v527 = vunpack.c.h.b16 %v368
    %v528 = vunpack.c.l.b16 %v369
    %v529 = vunpack.c.h.b16 %v369
    %v530 = vunpack.c.l.b16 %v370
    %v531 = vunpack.c.h.b16 %v370
    %v532 = vunpack.c.l.b16 %v371
    %v533 = vunpack.c.h.b16 %v371
    %v534 = vunpack.c.l.b16 %v372
    %v535 = vunpack.c.h.b16 %v372
    %v536 = vunpack.c.l.b16 %v373
    %v537 = vunpack.c.h.b16 %v373
    %v538 = vunpack.c.l.b16 %v374
    %v539 = vunpack.c.h.b16 %v374
    %v540 = vunpack.c.l.b16 %v375
    %v541 = vunpack.c.h.b16 %v375
    %v542 = vunpack.c.l.b16 %v376
    %v543 = vunpack.c.h.b16 %v376
    %v544 = vunpack.c.l.b16 %v377
    %v545 = vunpack.c.h.b16 %v377
    %v546 = vunpack.c.l.b16 %v378
    %v547 = vunpack.c.h.b16 %v378
    %v548 = vunpack.c.l.b16 %v379
    %v549 = vunpack.c.h.b16 %v379
    %v550 = vunpack.c.l.b16 %v380
    %v551 = vunpack.c.h.b16 %v380
    %v552 = vunpack.c.l.b16 %v381
    %v553 = vunpack.c.h.b16 %v381
    %v554 = vunpack.c.l.b16 %v382
    %v555 = vunpack.c.h.b16 %v382
    %v556 = vunpack.c.l.b16 %v383
    %v557 = vunpack.c.h.b16 %v383
    %v558 = vunpack.c.l.b16 %v384
    %v559 = vunpack.c.h.b16 %v384
    %v560 = vunpack.c.l.b16 %v385
    %v561 = vunpack.c.h.b16 %v385
    %v562 = vunpack.c.l.b16 %v386
    %v563 = vunpack.c.h.b16 %v386
    %v564 = vunpack.c.l.b16 %v387
    %v565 = vunpack.c.h.b16 %v387
    %v566 = vunpack.c.l.b16 %v388
    %v567 = vunpack.c.h.b16 %v388
    %v568 = vunpack.c.l.b16 %v389
    %v569 = vunpack.c.h.b16 %v389
    %v570 = vunpack.c.l.b16 %v390
    %v571 = vunpack.c.h.b16 %v390
    %v572 = vunpack.c.l.b16 %v391
    %v573 = vunpack.c.h.b16 %v391
    %v574 = vunpack.c.l.b16 %v392
    %v575 = vunpack.c.h.b16 %v392
    %v576 = vunpack.c.l.b16 %v393
    %v577 = vunpack.c.h.b16 %v393
    %v578 = vunpack.c.l.b16 %v394
    %v579 = vunpack.c.h.b16 %v394
    %v580 = vunpack.c.l.b16 %v395
    %v581 = vunpack.c.h.b16 %v395
    %v582 = vunpack.c.l.b16 %v396
    %v583 = vunpack.c.h.b16 %v396
    %v584 = vunpack.c.l.b16 %v397
    %v585 = vunpack.c.h.b16 %v397
    %v586 = vunpack.c.l.b16 %v398
    %v587 = vunpack.c.h.b16 %v398
    %v588 = vunpack.c.l.b16 %v399
    %v589 = vunpack.c.h.b16 %v399
    %v590 = vunpack.c.l.b16 %v400
    %v591 = vunpack.c.h.b16 %v400
    %v592 = vunpack.c.l.b16 %v401
    %v593 = vunpack.c.h.b16 %v401
    %v594 = vpack.c.b16 %v474, %v466
    %v595 = vpack.c.b16 %v475, %v467
    %v596 = vpack.c.b16 %v476, %v468
    %v597 = vpack.c.b16 %v477, %v469
    %v598 = vpack.c.b16 %v478, %v470
    %v599 = vpack.c.b16 %v479, %v471
    %v600 = vpack.c.b16 %v480, %v472
    %v601 = vpack.c.b16 %v481, %v473
    %v602 = vpack.c.b16 %v490, %v482
    %v603 = vpack.c.b16 %v491, %v483
    %v604 = vpack.c.b16 %v492, %v484
    %v605 = vpack.c.b16 %v493, %v485
    %v606 = vpack.c.b16 %v494, %v486
    %v607 = vpack.c.b16 %v495, %v487
    %v608 = vpack.c.b16 %v496, %v488
    %v609 = vpack.c.b16 %v497, %v489
    %v610 = vpack.c.b16 %v506, %v498
    %v611 = vpack.c.b16 %v507, %v499
    %v612 = vpack.c.b16 %v508, %v500
    %v613 = vpack.c.b16 %v509, %v501
    %v614 = vpack.c.b16 %v510, %v502
    %v615 = vpack.c.b16 %v511, %v503
    %v616 = vpack.c.b16 %v512, %v504
    %v617 = vpack.c.b16 %v513, %v505
    %v618 = vpack.c.b16 %v522, %v514
    %v619 = vpack.c.b16 %v523, %v515
    %v620 = vpack.c.b16 %v524, %v516
    %v621 = vpack.c.b16 %v525, %v517
    %v622 = vpack.c.b16 %v526, %v518
    %v623 = vpack.c.b16 %v527, %v519
    %v624 = vpack.c.b16 %v528, %v520
    %v625 = vpack.c.b16 %v529, %v521
    %v626 = vpack.c.b16 %v538, %v530
    %v627 = vpack.c.b16 %v539, %v531
    %v628 = vpack.c.b16 %v540, %v532
    %v629 = vpack.c.b16 %v541, %v533
    %v630 = vpack.c.b16 %v542, %v534
    %v631 = vpack.c.b16 %v543, %v535
    %v632 = vpack.c.b16 %v544, %v536
    %v633 = vpack.c.b16 %v545, %v537
    %v634 = vpack.c.b16 %v554, %v546
    %v635 = vpack.c.b16 %v555, %v547
    %v636 = vpack.c.b16 %v556, %v548
    %v637 = vpack.c.b16 %v557, %v549
    %v638 = vpack.c.b16 %v558, %v550
    %v639 = vpack.c.b16 %v559, %v551
    %v640 = vpack.c.b16 %v560, %v552
    %v641 = vpack.c.b16 %v561, %v553
    %v642 = vpack.c.b16 %v570, %v562
    %v643 = vpack.c.b16 %v571, %v563
    %v644 = vpack.c.b16 %v572, %v564
    %v645 = vpack.c.b16 %v573, %v565
    %v646 = vpack.c.b16 %v574, %v566
    %v647 = vpack.c.b16 %v575, %v567
    %v648 = vpack.c.b16 %v576, %v568
    %v649 = vpack.c.b16 %v577, %v569
    %v650 = vpack.c.b16 %v586, %v578
    %v651 = vpack.c.b16 %v587, %v579
    %v652 = vpack.c.b16 %v588, %v580
    %v653 = vpack.c.b16 %v589, %v581
    %v654 = vpack.c.b16 %v590, %v582
    %v655 = vpack.c.b16 %v591, %v583
    %v656 = vpack.c.b16 %v592, %v584
    %v657 = vpack.c.b16 %v593, %v585
    %722 = vmatprep.subr.bf16.mxu0 %v595
    %723 = vmatpush1.bf16.msra.mxu0 %v594
    %724 = vmatprep.subr.bf16.mxu0 %v603
    %725 = vmatpush1.bf16.msra.mxu0 %v602
    %726 = vmatprep.subr.bf16.mxu0 %v611
    %727 = vmatpush1.bf16.msra.mxu0 %v610
    %728 = vmatprep.subr.bf16.mxu0 %v619
    %729 = vmatpush1.bf16.msra.mxu0 %v618
    %730 = vmatprep.subr.bf16.mxu0 %v627
    %731 = vmatpush1.bf16.msra.mxu0 %v626
    %732 = vmatprep.subr.bf16.mxu0 %v635
    %733 = vmatpush1.bf16.msra.mxu0 %v634
    %734 = vmatprep.subr.bf16.mxu0 %v643
    %735 = vmatpush1.bf16.msra.mxu0 %v642
    %736 = vmatprep.subr.bf16.mxu0 %v651
    %737 = vmatpush1.bf16.msra.mxu0 %v650
    %738 = vmatprep.subr.bf16.mxu0 0
    %739 = vmatpush1.bf16.msra.mxu0 0
    %740 = vmatprep.subr.bf16.mxu0 0
    %741 = vmatpush1.bf16.msra.mxu0 0
    %742 = vmatprep.subr.bf16.mxu0 0
    %743 = vmatpush1.bf16.msra.mxu0 0
    %744 = vmatprep.subr.bf16.mxu0 0
    %745 = vmatpush1.bf16.msra.mxu0 0
    %746 = vmatprep.subr.bf16.mxu0 0
    %747 = vmatpush1.bf16.msra.mxu0 0
    %748 = vmatprep.subr.bf16.mxu0 0
    %749 = vmatpush1.bf16.msra.mxu0 0
    %750 = vmatprep.subr.bf16.mxu0 0
    %751 = vmatpush1.bf16.msra.mxu0 0
    %752 = vmatprep.subr.bf16.mxu0 0
    %753 = vmatpush1.bf16.msra.mxu0 0
    %754 = vmatprep.mubr.bf16.mxu0 0
    %755 = vmatmul.mubr.bf16.gmra.mrb[0].mxu0 %v337
    %v756 = vpop.f32.mrb[0].mxu0
    %v757 = vadd.f32 0.0, %v756
    %v758 = vpop.f32.mrb[0].mxu0
    %v759 = vadd.f32 0.0, %v758
    %v760 = vpop.f32.mrb[0].mxu0
    %v761 = vpop.f32.mrb[0].mxu0
    %762 = vdwg.mxu0
    %763 = vmatprep.subr.bf16.mxu0 %v597
    %764 = vmatpush1.bf16.msra.mxu0 %v596
    %765 = vmatprep.subr.bf16.mxu0 %v605
    %766 = vmatpush1.bf16.msra.mxu0 %v604
    %767 = vmatprep.subr.bf16.mxu0 %v613
    %768 = vmatpush1.bf16.msra.mxu0 %v612
    %769 = vmatprep.subr.bf16.mxu0 %v621
    %770 = vmatpush1.bf16.msra.mxu0 %v620
    %771 = vmatprep.subr.bf16.mxu0 %v629
    %772 = vmatpush1.bf16.msra.mxu0 %v628
    %773 = vmatprep.subr.bf16.mxu0 %v637
    %774 = vmatpush1.bf16.msra.mxu0 %v636
    %775 = vmatprep.subr.bf16.mxu0 %v645
    %776 = vmatpush1.bf16.msra.mxu0 %v644
    %777 = vmatprep.subr.bf16.mxu0 %v653
    %778 = vmatpush1.bf16.msra.mxu0 %v652
    %779 = vmatprep.subr.bf16.mxu0 0
    %780 = vmatpush1.bf16.msra.mxu0 0
    %781 = vmatprep.subr.bf16.mxu0 0
    %782 = vmatpush1.bf16.msra.mxu0 0
    %783 = vmatprep.subr.bf16.mxu0 0
    %784 = vmatpush1.bf16.msra.mxu0 0
    %785 = vmatprep.subr.bf16.mxu0 0
    %786 = vmatpush1.bf16.msra.mxu0 0
    %787 = vmatprep.subr.bf16.mxu0 0
    %788 = vmatpush1.bf16.msra.mxu0 0
    %789 = vmatprep.subr.bf16.mxu0 0
    %790 = vmatpush1.bf16.msra.mxu0 0
    %791 = vmatprep.subr.bf16.mxu0 0
    %792 = vmatpush1.bf16.msra.mxu0 0
    %793 = vmatprep.subr.bf16.mxu0 0
    %794 = vmatpush1.bf16.msra.mxu0 0
    %795 = vmatprep.mubr.bf16.mxu0 0
    %796 = vmatmul.mubr.bf16.gmra.mrb[0].mxu0 %v337
    %v797 = vpop.f32.mrb[0].mxu0
    %v798 = vadd.f32 0.0, %v797
    %v799 = vpop.f32.mrb[0].mxu0
    %v800 = vadd.f32 0.0, %v799
    %v801 = vpop.f32.mrb[0].mxu0
    %v802 = vpop.f32.mrb[0].mxu0
    %803 = vdwg.mxu0
    %804 = vmatprep.subr.bf16.mxu0 %v599
    %805 = vmatpush1.bf16.msra.mxu0 %v598
    %806 = vmatprep.subr.bf16.mxu0 %v607
    %807 = vmatpush1.bf16.msra.mxu0 %v606
    %808 = vmatprep.subr.bf16.mxu0 %v615
    %809 = vmatpush1.bf16.msra.mxu0 %v614
    %810 = vmatprep.subr.bf16.mxu0 %v623
    %811 = vmatpush1.bf16.msra.mxu0 %v622
    %812 = vmatprep.subr.bf16.mxu0 %v631
    %813 = vmatpush1.bf16.msra.mxu0 %v630
    %814 = vmatprep.subr.bf16.mxu0 %v639
    %815 = vmatpush1.bf16.msra.mxu0 %v638
    %816 = vmatprep.subr.bf16.mxu0 %v647
    %817 = vmatpush1.bf16.msra.mxu0 %v646
    %818 = vmatprep.subr.bf16.mxu0 %v655
    %819 = vmatpush1.bf16.msra.mxu0 %v654
    %820 = vmatprep.subr.bf16.mxu0 0
    %821 = vmatpush1.bf16.msra.mxu0 0
    %822 = vmatprep.subr.bf16.mxu0 0
    %823 = vmatpush1.bf16.msra.mxu0 0
    %824 = vmatprep.subr.bf16.mxu0 0
    %825 = vmatpush1.bf16.msra.mxu0 0
    %826 = vmatprep.subr.bf16.mxu0 0
    %827 = vmatpush1.bf16.msra.mxu0 0
    %828 = vmatprep.subr.bf16.mxu0 0
    %829 = vmatpush1.bf16.msra.mxu0 0
    %830 = vmatprep.subr.bf16.mxu0 0
    %831 = vmatpush1.bf16.msra.mxu0 0
    %832 = vmatprep.subr.bf16.mxu0 0
    %833 = vmatpush1.bf16.msra.mxu0 0
    %834 = vmatprep.subr.bf16.mxu0 0
    %835 = vmatpush1.bf16.msra.mxu0 0
    %836 = vmatprep.mubr.bf16.mxu0 0
    %837 = vmatmul.mubr.bf16.gmra.mrb[0].mxu0 %v337
    %v838 = vpop.f32.mrb[0].mxu0
    %v839 = vadd.f32 0.0, %v838
    %v840 = vpop.f32.mrb[0].mxu0
    %v841 = vadd.f32 0.0, %v840
    %v842 = vpop.f32.mrb[0].mxu0
    %v843 = vpop.f32.mrb[0].mxu0
    %844 = vdwg.mxu0
    %845 = vmatprep.subr.bf16.mxu0 %v601
    %846 = vmatpush1.bf16.msra.mxu0 %v600
    %847 = vmatprep.subr.bf16.mxu0 %v609
    %848 = vmatpush1.bf16.msra.mxu0 %v608
    %849 = vmatprep.subr.bf16.mxu0 %v617
    %850 = vmatpush1.bf16.msra.mxu0 %v616
    %851 = vmatprep.subr.bf16.mxu0 %v625
    %852 = vmatpush1.bf16.msra.mxu0 %v624
    %853 = vmatprep.subr.bf16.mxu0 %v633
    %854 = vmatpush1.bf16.msra.mxu0 %v632
    %855 = vmatprep.subr.bf16.mxu0 %v641
    %856 = vmatpush1.bf16.msra.mxu0 %v640
    %857 = vmatprep.subr.bf16.mxu0 %v649
    %858 = vmatpush1.bf16.msra.mxu0 %v648
    %859 = vmatprep.subr.bf16.mxu0 %v657
    %860 = vmatpush1.bf16.msra.mxu0 %v656
    %861 = vmatprep.subr.bf16.mxu0 0
    %862 = vmatpush1.bf16.msra.mxu0 0
    %863 = vmatprep.subr.bf16.mxu0 0
    %864 = vmatpush1.bf16.msra.mxu0 0
    %865 = vmatprep.subr.bf16.mxu0 0
    %866 = vmatpush1.bf16.msra.mxu0 0
    %867 = vmatprep.subr.bf16.mxu0 0
    %868 = vmatpush1.bf16.msra.mxu0 0
    %869 = vmatprep.subr.bf16.mxu0 0
    %870 = vmatpush1.bf16.msra.mxu0 0
    %871 = vmatprep.subr.bf16.mxu0 0
    %872 = vmatpush1.bf16.msra.mxu0 0
    %873 = vmatprep.subr.bf16.mxu0 0
    %874 = vmatpush1.bf16.msra.mxu0 0
    %875 = vmatprep.subr.bf16.mxu0 0
    %876 = vmatpush1.bf16.msra.mxu0 0
    %877 = vmatprep.mubr.bf16.mxu0 0
    %878 = vmatmul.mubr.bf16.gmra.mrb[0].mxu0 %v337
    %v879 = vpop.f32.mrb[0].mxu0
    %v880 = vadd.f32 0.0, %v879
    %v881 = vpop.f32.mrb[0].mxu0
    %v882 = vadd.f32 0.0, %v881
    %v883 = vpop.f32.mrb[0].mxu0
    %v884 = vpop.f32.mrb[0].mxu0
    %885 = vdwg.mxu0
    %v886 = vmul.f32 %v291, %v757
    %v887 = vmul.f32 %v296, %v759
    %v888 = vadd.f32 %v886, %v887
    %v889 = vmul.f32 %v302, %v798
    %v890 = vadd.f32 %v888, %v889
    %v891 = vmul.f32 %v308, %v800
    %v892 = vadd.f32 %v890, %v891
    %v893 = vmul.f32 %v314, %v839
    %v894 = vadd.f32 %v892, %v893
    %v895 = vmul.f32 %v320, %v841
    %v896 = vadd.f32 %v894, %v895
    %v897 = vmul.f32 %v326, %v880
    %v898 = vadd.f32 %v896, %v897
    %v899 = vmul.f32 %v332, %v882
    %v900 = vadd.f32 %v898, %v899
    %901 = vst [vmem:[#allocation10] sm:$0xff] %v900
    // Predicated region
    $region34: #{tpu_custom_call.1} parent=1 // pred_check
      _
    $region35: #{tpu_custom_call.1} parent=1 // pred_check_branch
      %903 = sbr.rel (0) target = $region37
    $region36: #{tpu_custom_call.1} parent=1 // pred_region
      %s905 = ssub.s32 128, 128
      %906 = vsyncadd [#allocation4], %s905
      %s908 = sshll.u32 [#allocation10], 4
      %s909 = int_to_ptr.vmem [resolvable:$true] %s908
      %911 = dma.vmem_to_hbm [thread:$0]  %s909, 128, %s4, [#allocation4]
    $region37: #{tpu_custom_call.1} parent=1 // pred_fallthru
      _
    // Predicated region
    $region38: #{tpu_custom_call.1} parent=1 // pred_check
      _
    $region39: #{tpu_custom_call.1} parent=1 // pred_check_branch
      %913 = sbr.rel (0) target = $region41
    $region40: #{tpu_custom_call.1} parent=1 // pred_region
      %914 = dma.done [#allocation4], 128
    $region41: #{tpu_custom_call.1} parent=1 // pred_fallthru
      _
    %915 = vsyncpa [#allocation3], 1
    %916 = vsyncpa [#allocation6], 1
    %917 = vsyncpa [#allocation9], 1
    %918 = vsyncpa [#allocation4], 1

</llo_original>
